<compile_context>
chip_gen: v5e
topology: v5e:2x2
jax: 0.10.0
libtpu: 0.0.40
codegen_flags: <defaults>
</compile_context>

<pallas_src>
import jax
import jax.numpy as jnp
from jax import lax
from jax.experimental import pallas as pl
from jax.experimental.pallas import tpu as pltpu

EPS = 1e-5
LANES = 128
SUBLANES = 8
VMEM_LIMIT_BYTES = 32 * 1024 * 1024


def _dice_full_kernel(pred_ref, gt_ref, dice_ref):
    """Small-plane path: one full (rows, 128) plane per grid step; grid = (N, K)."""
    x = pred_ref[...].astype(jnp.float32)
    y = gt_ref[...].astype(jnp.float32)
    inter = jnp.sum(x * y)
    union = jnp.sum(x + y)            # fused: sum(x) + sum(y) == sum(x + y)
    dice_ref[...] = jnp.reshape((2.0 * inter + EPS) / (union + EPS), (1, 1))


def _make_dice_tiled_kernel(row_tile, rows_total, needs_mask):
    """Large-plane path: grid = (N, K, n_tiles), reduction (row-tile) axis last."""
    groups = row_tile // SUBLANES     # row_tile is a multiple of 8 by construction

    def kernel(pred_ref, gt_ref, dice_ref, inter_acc, union_acc):
        h = pl.program_id(2)

        @pl.when(h == 0)
        def _():
            inter_acc[...] = jnp.zeros_like(inter_acc)
            union_acc[...] = jnp.zeros_like(union_acc)

        x = pred_ref[...].astype(jnp.float32)
        y = gt_ref[...].astype(jnp.float32)
        prod = x * y
        ssum = x + y
        if needs_mask:
            # Ragged last tile: rows past rows_total hold unspecified data.
            row_idx = h * row_tile + lax.broadcasted_iota(
                jnp.int32, (row_tile, LANES), 0)
            valid = row_idx < rows_total
            prod = jnp.where(valid, prod, 0.0)
            ssum = jnp.where(valid, ssum, 0.0)

        # VALU-only accumulation: fold row_tile rows into an (8, 128) accumulator
        # (elementwise vreg adds); single XLU reduce deferred to the finalize.
        inter_acc[...] += jnp.sum(prod.reshape(groups, SUBLANES, LANES), axis=0)
        union_acc[...] += jnp.sum(ssum.reshape(groups, SUBLANES, LANES), axis=0)

        @pl.when(h == pl.num_programs(2) - 1)
        def _():
            inter = jnp.sum(inter_acc[...])
            union = jnp.sum(union_acc[...])
            dice_ref[...] = jnp.reshape((2.0 * inter + EPS) / (union + EPS), (1, 1))

    return kernel


def soft_dice_loss1(y_pred, y_true, num_classes=4,
                    block_budget_bytes=4 * 1024 * 1024):
    """Pallas implementation of SoftDiceLoss1.forward (activation=None)."""
    N, C, H, W = y_pred.shape
    assert y_true.shape == y_pred.shape
    assert C >= num_classes + 1, "forward indexes channels 1..num_classes"
    assert num_classes == 4, "forward hardcodes a 4-term weighted combination"
    K = num_classes
    HW = H * W

    rows = -(-HW // LANES)            # ceil(HW / 128)
    pad = rows * LANES - HW

    def to_lane_dense(a):
        # Free contiguous reshape when HW % 128 == 0; otherwise a single zero-pad
        # copy (zeros add nothing to intersection or union).
        a = a.reshape(N, C, HW)
        if pad:
            a = jnp.pad(a, ((0, 0), (0, 0), (0, pad)))
        return a.reshape(N, C, rows, LANES)

    pred = to_lane_dense(y_pred)
    gt = to_lane_dense(y_true)

    itemsize = max(jnp.dtype(y_pred.dtype).itemsize,
                   jnp.dtype(y_true.dtype).itemsize)
    budget_rows = max(
        SUBLANES,
        (block_budget_bytes // (LANES * itemsize)) // SUBLANES * SUBLANES)

    out_shape = jax.ShapeDtypeStruct((N, K, 1, 1), jnp.float32)
    out_block = (pl.Squeezed(), pl.Squeezed(), 1, 1)

    if rows <= budget_rows:
        # Whole plane per (n, class): simplest and fastest for common seg sizes.
        in_block = (pl.Squeezed(), pl.Squeezed(), rows, LANES)
        dice = pl.pallas_call(
            _dice_full_kernel,
            out_shape=out_shape,
            grid=(N, K),
            in_specs=[
                pl.BlockSpec(in_block, lambda n, k: (n, k + 1, 0, 0)),
                pl.BlockSpec(in_block, lambda n, k: (n, k + 1, 0, 0)),
            ],
            out_specs=pl.BlockSpec(out_block, lambda n, k: (n, k, 0, 0)),
            compiler_params=pltpu.CompilerParams(
                dimension_semantics=("parallel", "parallel"),
                vmem_limit_bytes=VMEM_LIMIT_BYTES,
            ),
        )(pred, gt)
    else:
        row_tile = budget_rows
        n_tiles = -(-rows // row_tile)
        needs_mask = (rows % row_tile) != 0
        in_block = (pl.Squeezed(), pl.Squeezed(), row_tile, LANES)
        kernel = _make_dice_tiled_kernel(row_tile, rows, needs_mask)
        dice = pl.pallas_call(
            kernel,
            out_shape=out_shape,
            grid=(N, K, n_tiles),
            in_specs=[
                pl.BlockSpec(in_block, lambda n, k, h: (n, k + 1, h, 0)),
                pl.BlockSpec(in_block, lambda n, k, h: (n, k + 1, h, 0)),
            ],
            out_specs=pl.BlockSpec(out_block, lambda n, k, h: (n, k, 0, 0)),
            scratch_shapes=[
                pltpu.VMEM((SUBLANES, LANES), jnp.float32),   # intersection acc
                pltpu.VMEM((SUBLANES, LANES), jnp.float32),   # union acc
            ],
            compiler_params=pltpu.CompilerParams(
                dimension_semantics=("parallel", "parallel", "arbitrary"),
                vmem_limit_bytes=VMEM_LIMIT_BYTES,
            ),
        )(pred, gt)

    dice_nk = dice[:, :, 0, 0]                     # per-(batch, class) dice
    class_dice = jnp.sum(dice_nk, axis=0) / N      # diceCoeff: loss.sum() / N
    # Matches the reference exactly: 0.1*d0 + 0.3*d1 + 0.3*d2 + 0.3*d3/len(class_dice)
    mean_dice = (0.1 * class_dice[0] + 0.3 * class_dice[1]
                 + 0.3 * class_dice[2] + 0.3 * class_dice[3] / K)
    return 1.0 - mean_dice


def _reference(y_pred, y_true, num_classes=4):
    """Pure-jnp transcription of the PyTorch forward (activation=None)."""
    N = y_pred.shape[0]
    class_dice = []
    for i in range(1, num_classes + 1):
        p = y_pred[:, i, :, :].reshape(N, -1).astype(jnp.float32)
        g = y_true[:, i, :, :].reshape(N, -1).astype(jnp.float32)
        inter = jnp.sum(p * g, axis=1)
        uni = jnp.sum(p, axis=1) + jnp.sum(g, axis=1)
        class_dice.append(jnp.sum((2.0 * inter + EPS) / (uni + EPS)) / N)
    mean_dice = (0.1 * class_dice[0] + 0.3 * class_dice[1]
                 + 0.3 * class_dice[2] + 0.3 * class_dice[3] / len(class_dice))
    return 1.0 - mean_dice


def _make_inputs(key, N, C, H, W):
    k_pred, k_true = jax.random.split(key)
    y_pred = jax.random.normal(k_pred, (N, C, H, W), dtype=jnp.float32)
    y_true = (jax.random.uniform(k_true, (N, C, H, W)) > 0.5).astype(jnp.float32)
    return y_pred, y_true


if __name__ == "__main__":
    num_classes = 4
    C = num_classes + 1                       # channel 0 = background (unused)
    key = jax.random.PRNGKey(0)
    k1, k2, k3 = jax.random.split(key, 3)

    # 1) Fast path: HW multiple of 128, whole plane per step (no copies).
    y_pred, y_true = _make_inputs(k1, 2, C, 16, 16)
    loss = jax.block_until_ready(soft_dice_loss1(y_pred, y_true, num_classes))
    ref = _reference(y_pred, y_true, num_classes)
    assert jnp.allclose(loss, ref, rtol=1e-5, atol=1e-5), (loss, ref)

    # 2) Tiled path with ragged tail mask (tiny budget forces row_tile < rows).
    y_pred, y_true = _make_inputs(k2, 2, C, 48, 48)
    loss = jax.block_until_ready(
        soft_dice_loss1(y_pred, y_true, num_classes, block_budget_bytes=8 * 1024))
    ref = _reference(y_pred, y_true, num_classes)
    assert jnp.allclose(loss, ref, rtol=1e-5, atol=1e-5), (loss, ref)

    # 3) HW not a multiple of 128 (zero-pad path).
    y_pred, y_true = _make_inputs(k3, 2, C, 12, 12)
    loss = jax.block_until_ready(soft_dice_loss1(y_pred, y_true, num_classes))
    ref = _reference(y_pred, y_true, num_classes)
    assert jnp.allclose(loss, ref, rtol=1e-5, atol=1e-5), (loss, ref)

    print("KERNEL_OK")
</pallas_src>

<mosaic_0001>
module attributes {stable_mosaic.version = 11 : i64} {
  func.func @_dice_full_kernel(%arg0: i32, %arg1: i32, %arg2: memref<1x1x2x128xf32, #tpu.memory_space<vmem>>, %arg3: memref<1x1x2x128xf32, #tpu.memory_space<vmem>>, %arg4: memref<1x1x1x1xf32, #tpu.memory_space<vmem>>) attributes {dimension_semantics = [#tpu.dimension_semantics<parallel>, #tpu.dimension_semantics<parallel>], iteration_bounds = array<i64: 2, 4>, scalar_prefetch = 0 : i64, scratch_operands = 0 : i64, tpu.core_type = #tpu.core_type<tc>, window_params = [{transform_indices = @transform_0, window_bounds = array<i64: 1, 1, 2, 128>}, {transform_indices = @transform_1, window_bounds = array<i64: 1, 1, 2, 128>}, {transform_indices = @transform_2, window_bounds = array<i64: 1, 1, 1, 1>}]} {
    %c0 = arith.constant 0 : index
    %c0_0 = arith.constant 0 : index
    %c0_1 = arith.constant 0 : index
    %c0_2 = arith.constant 0 : index
    %0 = vector.load %arg2[%c0, %c0_0, %c0_1, %c0_2] : memref<1x1x2x128xf32, #tpu.memory_space<vmem>>, vector<1x1x2x128xf32>
    %1 = vector.shape_cast %0 : vector<1x1x2x128xf32> to vector<2x128xf32>
    %c0_3 = arith.constant 0 : index
    %c0_4 = arith.constant 0 : index
    %c0_5 = arith.constant 0 : index
    %c0_6 = arith.constant 0 : index
    %2 = vector.load %arg3[%c0_3, %c0_4, %c0_5, %c0_6] : memref<1x1x2x128xf32, #tpu.memory_space<vmem>>, vector<1x1x2x128xf32>
    %3 = vector.shape_cast %2 : vector<1x1x2x128xf32> to vector<2x128xf32>
    %4 = arith.mulf %1, %3 : vector<2x128xf32>
    %5 = vector.shape_cast %4 : vector<2x128xf32> to vector<1x2x128xf32>
    %cst = arith.constant dense<0.000000e+00> : vector<1xf32>
    %6 = vector.multi_reduction <add>, %5, %cst [1, 2] : vector<1x2x128xf32> to vector<1xf32>
    %7 = vector.shape_cast %6 : vector<1xf32> to vector<1x1x1xf32>
    %8 = vector.extract %7[0, 0, 0] : f32 from vector<1x1x1xf32>
    %9 = arith.addf %1, %3 : vector<2x128xf32>
    %10 = vector.shape_cast %9 : vector<2x128xf32> to vector<1x2x128xf32>
    %cst_7 = arith.constant dense<0.000000e+00> : vector<1xf32>
    %11 = vector.multi_reduction <add>, %10, %cst_7 [1, 2] : vector<1x2x128xf32> to vector<1xf32>
    %12 = vector.shape_cast %11 : vector<1xf32> to vector<1x1x1xf32>
    %13 = vector.extract %12[0, 0, 0] : f32 from vector<1x1x1xf32>
    %cst_8 = arith.constant 2.000000e+00 : f32
    %14 = arith.mulf %cst_8, %8 : f32
    %cst_9 = arith.constant 9.99999974E-6 : f32
    %15 = arith.addf %14, %cst_9 : f32
    %cst_10 = arith.constant 9.99999974E-6 : f32
    %16 = arith.addf %13, %cst_10 : f32
    %17 = arith.divf %15, %16 : f32
    %18 = vector.broadcast %17 : f32 to vector<1x1xf32>
    %c0_11 = arith.constant 0 : index
    %c0_12 = arith.constant 0 : index
    %c0_13 = arith.constant 0 : index
    %c0_14 = arith.constant 0 : index
    %19 = vector.load %arg4[%c0_11, %c0_12, %c0_13, %c0_14] : memref<1x1x1x1xf32, #tpu.memory_space<vmem>>, vector<1x1x1x1xf32>
    %20 = vector.shape_cast %19 : vector<1x1x1x1xf32> to vector<1x1xf32>
    %21 = vector.shape_cast %18 : vector<1x1xf32> to vector<1x1x1x1xf32>
    tpu.vector_store %arg4[%c0_11, %c0_12, %c0_13, %c0_14], %21 {strides = array<i32>} : memref<1x1x1x1xf32, #tpu.memory_space<vmem>>, vector<1x1x1x1xf32>,
    return
  }
  func.func @transform_0(%arg0: i32, %arg1: i32) -> (i32, i32, i32, i32) {
    %c1_i32 = arith.constant 1 : i32
    %0 = arith.addi %arg1, %c1_i32 : i32
    %c0_i32 = arith.constant 0 : i32
    %c0_i32_0 = arith.constant 0 : i32
    %c0_i32_1 = arith.constant 0 : i32
    return %arg0, %0, %c0_i32, %c0_i32_0 : i32, i32, i32, i32
  }
  func.func @transform_1(%arg0: i32, %arg1: i32) -> (i32, i32, i32, i32) {
    %c1_i32 = arith.constant 1 : i32
    %0 = arith.addi %arg1, %c1_i32 : i32
    %c0_i32 = arith.constant 0 : i32
    %c0_i32_0 = arith.constant 0 : i32
    %c0_i32_1 = arith.constant 0 : i32
    return %arg0, %0, %c0_i32, %c0_i32_0 : i32, i32, i32, i32
  }
  func.func @transform_2(%arg0: i32, %arg1: i32) -> (i32, i32, i32, i32) {
    %c0_i32 = arith.constant 0 : i32
    %c0_i32_0 = arith.constant 0 : i32
    %c0_i32_1 = arith.constant 0 : i32
    return %arg0, %arg1, %c0_i32, %c0_i32_0 : i32, i32, i32, i32
  }
}

</mosaic_0001>

<llo_original>
// kernel: tpu_custom_call.1
$region0: #{tpu_custom_call.1}
  #allocation0 [shape = 'u32[]', space=smem, size = 0x4, offset = 0x4, fixed_abs, tag = 'smem constant byte address 0x4 - core index']
  #allocation1 [shape = 'u32[72,128]{1,0:T(1,128)}', space=vmem, size = 0x9000, scoped, tag = 'internal scratch']
  %s0 = inlined_call_operand.hbm [shape: f32[2,5,2,128], index: 0, kind: input, shape index: {}]
  %s1 = inlined_call_operand.hbm [shape: f32[2,5,2,128], index: 1, kind: input, shape index: {}]
  %s2 = inlined_call_operand.vmem [shape: f32[2,4,1,1], index: 2, kind: output, shape index: {}]
  %s3 = sld [smem:[#allocation0]]
  $region49: #{tpu_custom_call.1} parent=0
    _
  %s5 = ssub.s32 1, %s3
  %s6 = scalar_select 0, %s5, %s3
  $region1: #{tpu_custom_call.1} parent=0
    #allocation2 [shape = 'u8[2048]{0}', space=vmem, size = 0x800, scoped, tag = 'input window, operand 0']
    #allocation3 [shape = 's32[2]{0}', space=sflag, size = 0x8, scoped, tag = 'scoped memory for tpu_custom_call.1']
    #allocation4 [shape = 'u8[2048]{0}', space=vmem, size = 0x800, scoped, tag = 'input window, operand 1']
    #allocation5 [shape = 's32[2]{0}', space=sflag, size = 0x8, scoped, tag = 'scoped memory for tpu_custom_call.1']
    %7 = vsyncpa [#allocation3], 0
    %s8 = scalar_lea.sflag [#allocation3], 1
    %9 = vsyncpa %s8, 0
    %10 = vsyncpa [#allocation5], 0
    %s11 = scalar_lea.sflag [#allocation5], 1
    %12 = vsyncpa %s11, 0
    loop: start=0, step=1, limit=10
    $region2: #{tpu_custom_call.1} parent=1 // loop_pre_header
      _
    $region3: #{tpu_custom_call.1} parent=1 // loop_header
      %s14 = sphi 0, %s18
      %p15 = scmp.ge.s32.totalorder %s14, 10
      %s21 = sphi 0, %s33
      %s22 = sphi 0, %s29
      %s23 = sphi 0, %s21
      %s24 = sphi 0, %s22
      %s25 = sphi 0, %s23
      %s26 = sphi 0, %s24
      %s40 = sphi 0, %s42
      %s43 = sphi 0, %s40
      %s44 = sphi 0, %s43
      %s60 = sphi 0, %s44
      %s70 = sphi 0, %s72
      %s73 = sphi 0, %s70
      %s74 = sphi 0, %s73
      %s90 = sphi 0, %s74
      %s98 = sphi 0, %s100
      %s101 = sphi 0, %s98
      %s102 = sphi 0, %s101
      %s118 = sphi 0, %s102
    $region4: #{tpu_custom_call.1} parent=1 // loop_header_branch
      %17 = sbr.rel (%p15) target = $region8
    $region5: #{tpu_custom_call.1} parent=1 // loop_body
      %s19 = ssub.s32 %s14, 1
      %s20 = ssub.s32 %s14, 2
      %s27 = sadd.s32 1, %s22
      %p28 = scmp.ge.s32.totalorder %s27, 4
      %s29 = scalar_select %p28, 0, %s27
      %s30 = sadd.s32 1, %s21
      %s31 = scalar_select %p28, %s30, %s21
      %p32 = scmp.ge.s32.totalorder %s31, 2
      %s33 = scalar_select %p32, 0, %s31
      %s34 = sadd.s32 %s22, 1
      %s35 = sadd.s32 %s29, 1
      %s36 = ssub.s32 %s21, %s33
      %s37 = ssub.s32 %s34, %s35
      %s38 = sor.u32 %s36, %s37
      %p39 = scmp.eq.s32.totalorder %s38, 0
      %s41 = sadd.s32 %s40, 1
      %s42 = scalar_select %p39, %s40, %s41
      %p45 = pneg %p39
      %p46 = scmp.eq.s32.totalorder %s14, 7
      %p47 = por %p45, %p46
      %p48 = scmp.ne.s32.totalorder %s40, %s43
      %p49 = scmp.eq.s32.totalorder %s14, 0
      %p50 = por %p48, %p49
      %p51 = scmp.ne.s32.totalorder %s40, %s43
      %p52 = scmp.eq.s32.totalorder %s19, 7
      %p53 = por %p51, %p52
      %p54 = scmp.ne.s32.totalorder %s43, %s44
      %p55 = scmp.eq.s32.totalorder %s19, 0
      %p56 = por %p54, %p55
      %p57 = scmp.ne.s32.totalorder %s43, %s44
      %p58 = scmp.eq.s32.totalorder %s20, 7
      %p59 = por %p57, %p58
      %p61 = scmp.ne.s32.totalorder %s44, %s60
      %p62 = scmp.eq.s32.totalorder %s20, 0
      %p63 = por %p61, %p62
      %s64 = sadd.s32 %s22, 1
      %s65 = sadd.s32 %s29, 1
      %s66 = ssub.s32 %s21, %s33
      %s67 = ssub.s32 %s64, %s65
      %s68 = sor.u32 %s66, %s67
      %p69 = scmp.eq.s32.totalorder %s68, 0
      %s71 = sadd.s32 %s70, 1
      %s72 = scalar_select %p69, %s70, %s71
      %p75 = pneg %p69
      %p76 = scmp.eq.s32.totalorder %s14, 7
      %p77 = por %p75, %p76
      %p78 = scmp.ne.s32.totalorder %s70, %s73
      %p79 = scmp.eq.s32.totalorder %s14, 0
      %p80 = por %p78, %p79
      %p81 = scmp.ne.s32.totalorder %s70, %s73
      %p82 = scmp.eq.s32.totalorder %s19, 7
      %p83 = por %p81, %p82
      %p84 = scmp.ne.s32.totalorder %s73, %s74
      %p85 = scmp.eq.s32.totalorder %s19, 0
      %p86 = por %p84, %p85
      %p87 = scmp.ne.s32.totalorder %s73, %s74
      %p88 = scmp.eq.s32.totalorder %s20, 7
      %p89 = por %p87, %p88
      %p91 = scmp.ne.s32.totalorder %s74, %s90
      %p92 = scmp.eq.s32.totalorder %s20, 0
      %p93 = por %p91, %p92
      %s94 = ssub.s32 %s21, %s33
      %s95 = ssub.s32 %s22, %s29
      %s96 = sor.u32 %s94, %s95
      %p97 = scmp.eq.s32.totalorder %s96, 0
      %s99 = sadd.s32 %s98, 1
      %s100 = scalar_select %p97, %s98, %s99
      %p103 = pneg %p97
      %p104 = scmp.eq.s32.totalorder %s14, 7
      %p105 = por %p103, %p104
      %p106 = scmp.ne.s32.totalorder %s98, %s101
      %p107 = scmp.eq.s32.totalorder %s14, 0
      %p108 = por %p106, %p107
      %p109 = scmp.ne.s32.totalorder %s98, %s101
      %p110 = scmp.eq.s32.totalorder %s19, 7
      %p111 = por %p109, %p110
      %p112 = scmp.ne.s32.totalorder %s101, %s102
      %p113 = scmp.eq.s32.totalorder %s19, 0
      %p114 = por %p112, %p113
      %p115 = scmp.ne.s32.totalorder %s101, %s102
      %p116 = scmp.eq.s32.totalorder %s20, 7
      %p117 = por %p115, %p116
      %p119 = scmp.ne.s32.totalorder %s102, %s118
      %p120 = scmp.eq.s32.totalorder %s20, 0
      %p121 = por %p119, %p120
      %p122 = scmp.le.s32.totalorder 1, %s14
      %p123 = scmp.lt.s32.totalorder %s14, 9
      %p124 = pnand %p122, %p123
      %p125 = pneg %p124
      // Predicated region
      $region9: #{tpu_custom_call.1} parent=5 // pred_check
        _
      $region10: #{tpu_custom_call.1} parent=5 // pred_check_branch
        %127 = sbr.rel (%p124) target = $region12
      $region11: #{tpu_custom_call.1} parent=5 // pred_region
        %s128 = ssub.s32 %s14, 1
      $region12: #{tpu_custom_call.1} parent=5 // pred_fallthru
        _
      %p129 = scmp.lt.s32.totalorder %s14, 8
      // Predicated region
      $region13: #{tpu_custom_call.1} parent=5 // pred_check
        %p130 = pneg %p129
      $region14: #{tpu_custom_call.1} parent=5 // pred_check_branch
        %132 = sbr.rel (%p130) target = $region16
      $region15: #{tpu_custom_call.1} parent=5 // pred_region
        // Predicated region
        $region17: #{tpu_custom_call.1} parent=15 // pred_check
          %p133 = pneg %p50
        $region18: #{tpu_custom_call.1} parent=15 // pred_check_branch
          %135 = sbr.rel (%p133) target = $region20
        $region19: #{tpu_custom_call.1} parent=15 // pred_region
          %s136 = sand.u32 %s40, 1
          %s137 = scalar_lea.sflag [#allocation3], %s136
          %s138 = sand.u32 %s40, 1
          %s139 = smul.addr %s138, 2
          %s140 = scalar_lea.vmem [#allocation2], %s139
          %s141 = sadd.s32 %s22, 1
          %143 = vsyncadd %s137, 0
          %s144 = smul.addr %s21, 5
          %s145 = sadd.s32 %s141, %s144
          %s146 = smul.addr %s145, 2
          %s147 = scalar_lea.hbm %s0, %s146
          %s149 = sshll.u32 %s147, 4
          %s150 = int_to_ptr.hbm [resolvable:$true] %s149
          %s151 = sshll.u32 %s140, 4
          %s152 = int_to_ptr.vmem [resolvable:$true] %s151
          %154 = dma.hbm_to_vmem [thread:$0]  %s150, 32, %s152, %s137
        $region20: #{tpu_custom_call.1} parent=15 // pred_fallthru
          _
        // Predicated region
        $region21: #{tpu_custom_call.1} parent=15 // pred_check
          %p155 = pneg %p80
        $region22: #{tpu_custom_call.1} parent=15 // pred_check_branch
          %157 = sbr.rel (%p155) target = $region24
        $region23: #{tpu_custom_call.1} parent=15 // pred_region
          %s158 = sand.u32 %s70, 1
          %s159 = scalar_lea.sflag [#allocation5], %s158
          %s160 = sand.u32 %s70, 1
          %s161 = smul.addr %s160, 2
          %s162 = scalar_lea.vmem [#allocation4], %s161
          %s163 = sadd.s32 %s22, 1
          %165 = vsyncadd %s159, 0
          %s166 = smul.addr %s21, 5
          %s167 = sadd.s32 %s163, %s166
          %s168 = smul.addr %s167, 2
          %s169 = scalar_lea.hbm %s1, %s168
          %s171 = sshll.u32 %s169, 4
          %s172 = int_to_ptr.hbm [resolvable:$true] %s171
          %s173 = sshll.u32 %s162, 4
          %s174 = int_to_ptr.vmem [resolvable:$true] %s173
          %176 = dma.hbm_to_vmem [thread:$0]  %s172, 32, %s174, %s159
        $region24: #{tpu_custom_call.1} parent=15 // pred_fallthru
          _
      $region16: #{tpu_custom_call.1} parent=5 // pred_fallthru
        _
      %p177 = scmp.le.s32.totalorder 1, %s14
      %p178 = scmp.lt.s32.totalorder %s14, 9
      %p179 = pnand %p177, %p178
      %p180 = pneg %p179
      // Predicated region
      $region25: #{tpu_custom_call.1} parent=5 // pred_check
        _
      $region26: #{tpu_custom_call.1} parent=5 // pred_check_branch
        %182 = sbr.rel (%p179) target = $region28
      $region27: #{tpu_custom_call.1} parent=5 // pred_region
        %s183 = ssub.s32 %s14, 1
        %s184 = sand.u32 %s43, 1
        %s185 = scalar_lea.sflag [#allocation3], %s184
        %s186 = sand.u32 %s43, 1
        %s187 = smul.addr %s186, 2
        %s188 = scalar_lea.vmem [#allocation2], %s187
        // Predicated region
        $region29: #{tpu_custom_call.1} parent=27 // pred_check
          %p189 = pneg %p56
        $region30: #{tpu_custom_call.1} parent=27 // pred_check_branch
          %191 = sbr.rel (%p189) target = $region32
        $region31: #{tpu_custom_call.1} parent=27 // pred_region
          %193 = dma.done %s185, 32
        $region32: #{tpu_custom_call.1} parent=27 // pred_fallthru
          _
        %s194 = sand.u32 %s73, 1
        %s195 = scalar_lea.sflag [#allocation5], %s194
        %s196 = sand.u32 %s73, 1
        %s197 = smul.addr %s196, 2
        %s198 = scalar_lea.vmem [#allocation4], %s197
        // Predicated region
        $region33: #{tpu_custom_call.1} parent=27 // pred_check
          %p199 = pneg %p86
        $region34: #{tpu_custom_call.1} parent=27 // pred_check_branch
          %201 = sbr.rel (%p199) target = $region36
        $region35: #{tpu_custom_call.1} parent=27 // pred_region
          %203 = dma.done %s195, 32
        $region36: #{tpu_custom_call.1} parent=27 // pred_fallthru
          _
        %s204 = sand.u32 %s43, 1
        %s205 = scalar_lea.sflag [#allocation3], %s204
        %s206 = sand.u32 %s43, 1
        %s207 = smul.addr %s206, 2
        %s208 = scalar_lea.vmem [#allocation2], %s207
        %p209 = pneg %p56
        %p210 = pneg %p53
        %s211 = sand.u32 %s73, 1
        %s212 = scalar_lea.sflag [#allocation5], %s211
        %s213 = sand.u32 %s73, 1
        %s214 = smul.addr %s213, 2
        %s215 = scalar_lea.vmem [#allocation4], %s214
        %p216 = pneg %p86
        %p217 = pneg %p83
        %p218 = pneg %p114
        %p219 = pneg %p111
        %p220 = scmp.lt.s32.totalorder %s23, 1
        %s221 = scalar_select %p220, %s23, 1
        %p222 = scmp.lt.s32.totalorder %s24, 3
        %s223 = scalar_select %p222, %s24, 3
        %s224 = smul.addr %s221, 4
        %s225 = sadd.s32 %s223, %s224
        %s226 = scalar_lea.vmem %s2, %s225
        %s227 = sadd.s32 %s24, 1
        %s228 = sadd.s32 %s24, 1
        %p229 = scmp.lt.s32.totalorder %s23, 1
        %s230 = scalar_select %p229, %s23, 1
        %p231 = scmp.lt.s32.totalorder %s24, 3
        %s232 = scalar_select %p231, %s24, 3
        %s233 = smul.addr %s230, 4
        %s234 = sadd.s32 %s232, %s233
        %s235 = scalar_lea.vmem %s2, %s234
        %v236 = vld [vmem:[%s188] sm:$0x3]
        %v237 = vld [vmem:[%s198] sm:$0x3]
        %v238 = vmul.f32 %v236, %v237
        %vm239 = vcmask 1041408
        %v240 = vsel %vm239, %v238, 0.0
        %241 = vadd.xlane.f32.xlu0 %v240
        %v242 = vpop.xlane.xlu0 %241
        %v243 = vrot.slane %v242, 4
        %v244 = vadd.f32 %v242, %v243
        %v245 = vrot.slane %v244, 2
        %v246 = vadd.f32 %v244, %v245
        %v247 = vrot.slane %v246, 1
        %v248 = vadd.f32 %v246, %v247
        %s249 = vtos %v248
        %v250 = vadd.f32 %v236, %v237
        %v251 = vsel %vm239, %v250, 0.0
        %252 = vadd.xlane.f32.xlu0 %v251
        %v253 = vpop.xlane.xlu0 %252
        %v254 = vrot.slane %v253, 4
        %v255 = vadd.f32 %v253, %v254
        %v256 = vrot.slane %v255, 2
        %v257 = vadd.f32 %v255, %v256
        %v258 = vrot.slane %v257, 1
        %v259 = vadd.f32 %v257, %v258
        %s260 = vtos %v259
        %s261 = smul.f32 %s249, 2.0
        %s262 = sadd.f32 %s261, 1e-05
        %s263 = sadd.f32 %s260, 1e-05
        %v264 = vstv %s263
        %v265 = vrcp.pop %v264
        %v266 = vmul.f32 %v264, %v265
        %v267 = vsub.f32 1.0, %v266
        %v268 = vmul.f32 %v265, %v267
        %v269 = vadd.f32 %v265, %v268
        %vm270 = vweird.f32 %v264
        %vm271 = vweird.f32 %v265
        %vm272 = vmor %vm270, %vm271
        %v273 = vsel %vm272, %v265, %v269
        %v274 = vand.u32 2147483647, %v264
        %vm275 = vcmp.eq.f32.partialorder %v274, 8.507059e+37
        %v276 = vand.u32 %v264, 2147483648
        %v277 = vor.u32 1.1754944e-38, %v276
        %v278 = vsel %vm275, %v277, %v273
        %s279 = vtos %v278
        %s280 = smul.f32 %s262, %s279
        %v281 = vstv %s280
        %vm282 = vcmask 0
        %283 = vst.msk [vmem:[%s235] sm:$0x1] %vm282, %v281
        %p284 = scmp.lt.s32.totalorder %s23, 1
        %s285 = scalar_select %p284, %s23, 1
        %p286 = scmp.lt.s32.totalorder %s24, 3
        %s287 = scalar_select %p286, %s24, 3
        %s288 = smul.addr %s285, 4
        %s289 = sadd.s32 %s287, %s288
        %s290 = scalar_lea.vmem %s2, %s289
        // Predicated region
        $region37: #{tpu_custom_call.1} parent=27 // pred_check
          %p291 = pneg %p111
        $region38: #{tpu_custom_call.1} parent=27 // pred_check_branch
          %293 = sbr.rel (%p291) target = $region40
        $region39: #{tpu_custom_call.1} parent=27 // pred_region
          _
        $region40: #{tpu_custom_call.1} parent=27 // pred_fallthru
          _
      $region28: #{tpu_custom_call.1} parent=5 // pred_fallthru
        _
      %p294 = scmp.le.s32.totalorder 2, %s14
      // Predicated region
      $region41: #{tpu_custom_call.1} parent=5 // pred_check
        %p295 = pneg %p294
      $region42: #{tpu_custom_call.1} parent=5 // pred_check_branch
        %297 = sbr.rel (%p295) target = $region44
      $region43: #{tpu_custom_call.1} parent=5 // pred_region
        %s298 = ssub.s32 %s14, 2
        // Predicated region
        $region45: #{tpu_custom_call.1} parent=43 // pred_check
          %p299 = pneg %p117
        $region46: #{tpu_custom_call.1} parent=43 // pred_check_branch
          %301 = sbr.rel (%p299) target = $region48
        $region47: #{tpu_custom_call.1} parent=43 // pred_region
          %p302 = scmp.lt.s32.totalorder %s25, 1
          %s303 = scalar_select %p302, %s25, 1
          %p304 = scmp.lt.s32.totalorder %s26, 3
          %s305 = scalar_select %p304, %s26, 3
          %s306 = smul.addr %s303, 4
          %s307 = sadd.s32 %s305, %s306
          %s308 = scalar_lea.vmem %s2, %s307
        $region48: #{tpu_custom_call.1} parent=43 // pred_fallthru
          _
      $region44: #{tpu_custom_call.1} parent=5 // pred_fallthru
        _
    $region6: #{tpu_custom_call.1} parent=1 // loop_footer
      %s18 = sadd.s32 1, %s14
    $region7: #{tpu_custom_call.1} parent=1 // loop_footer_branch
      %13 = sbr.rel target = $region3
    $region8: #{tpu_custom_call.1} parent=1 // loop_exit
      _
    %309 = vsyncpa [#allocation3], 1
    %s310 = scalar_lea.sflag [#allocation3], 1
    %311 = vsyncpa %s310, 1
    %312 = vsyncpa [#allocation5], 1
    %s313 = scalar_lea.sflag [#allocation5], 1
    %314 = vsyncpa %s313, 1

</llo_original>
